<compile_context>
chip_gen: v6e
topology: v6e:2x2x1
jax: 0.10.0
libtpu: 0.0.40
codegen_flags: <defaults>
</compile_context>

<pallas_src>
import jax
import jax.numpy as jnp
from jax.experimental import pallas as pl
from jax.experimental.pallas import tpu as pltpu


# ----------------------------------------------------------------------------
# helpers
# ----------------------------------------------------------------------------
def _round_up(x, m):
    return ((int(x) + m - 1) // m) * m


def _make_pow(gamma):
    """Specialise x**gamma: small integer gammas become VPU multiplies."""
    g = float(gamma)
    if g == 0.0:
        return lambda x: jnp.ones_like(x)
    if g == 1.0:
        return lambda x: x
    if g == 2.0:
        return lambda x: x * x
    if g == float(int(g)) and 0.0 < g <= 4.0:
        n = int(g)

        def _int_pow(x):
            r = x
            for _ in range(n - 1):
                r = r * x
            return r

        return _int_pow
    return lambda x: jnp.power(x, g)


def _vmem_capacity_bytes():
    """Physical per-core VMEM; conservative 64 MiB (v7x) fallback."""
    try:
        info = pltpu.get_tpu_info()
        for name in ("vmem_capacity_bytes", "vmem_size_bytes", "vmem_bytes"):
            v = getattr(info, name, None)
            if v:
                return int(v)
    except Exception:
        pass
    return 64 << 20


def _pick_rows(n_rows, dbuf_row_bytes, temp_row_bytes, capacity_bytes,
               cap_rows=None):
    """Largest row tile (multiple of 8) whose double-buffered input blocks plus
    the estimated in-kernel f32 temporaries fit in ~70% of VMEM capacity."""
    budget = max(int(capacity_bytes * 0.70) - (2 << 20), 4 << 20)
    per_row = 2 * int(dbuf_row_bytes) + int(temp_row_bytes)
    tb = budget // max(per_row, 1)
    if cap_rows is not None:
        tb = min(tb, int(cap_rows))
    tb = max(8, (tb // 8) * 8)
    if tb >= n_rows:
        return int(n_rows)            # single full-extent tile (always legal)
    return int(tb)


def _vmem_limit_bytes(usage_bytes, capacity_bytes):
    """Scoped VMEM limit: estimated usage + headroom, capped below physical."""
    limit = int(usage_bytes) + (8 << 20)
    limit = max(limit, 32 << 20)
    limit = min(limit, int(capacity_bytes) - (6 << 20))
    return int(limit)


# ----------------------------------------------------------------------------
# kernels
# ----------------------------------------------------------------------------
def _softmax_focal_kernel(alpha, gamma, epsilon, total_rows, tb, tiles_per_core):
    pow_fn = _make_pow(gamma)

    def kernel(target_ref, logits_ref, out_ref):
        c = pl.program_id(0)          # "parallel" core-chunk index
        i = pl.program_id(1)          # "arbitrary" tile index within the chunk

        @pl.when(i == 0)
        def _():
            out_ref[...] = jnp.zeros_like(out_ref)

        logits = logits_ref[...].astype(jnp.float32)            # (TB, C)
        tgt = target_ref[...]                                    # (TB, 1) int32

        # Stable softmax pieces; gather the target-class numerator directly
        # from e via a where-select (no f32 one-hot temporary, no second exp).
        m = jnp.max(logits, axis=-1, keepdims=True)
        e = jnp.exp(logits - m)
        sum_e = jnp.sum(e, axis=-1, keepdims=True)               # (TB, 1)

        cls = jax.lax.broadcasted_iota(jnp.int32, logits.shape, 1)
        e_t = jnp.sum(jnp.where(cls == tgt, e, 0.0), axis=-1, keepdims=True)
        p_t = e_t / sum_e                                        # (TB, 1)

        loss_row = (-alpha) * pow_fn(1.0 - p_t) * jnp.log(p_t + epsilon)

        # Mask rows beyond the true batch (remainder / phantom tiles).
        v = c * tiles_per_core + i                               # virtual tile
        row = v * tb + jax.lax.broadcasted_iota(jnp.int32, loss_row.shape, 0)
        loss_row = jnp.where(row < total_rows, loss_row, 0.0)

        # Per-row loss is a lane-1 column already, so the per-step reduce to
        # scalar is small relative to the exp over (TB, C); the wrapper does
        # the final divide.
        out_ref[...] += jnp.sum(loss_row).reshape(1, 1, 1)

    return kernel


def _sigmoid_focal_kernel(alpha, gamma, epsilon, total_rows, tr, tiles_per_core):
    pow_fn = _make_pow(gamma)

    def kernel(target_ref, logits_ref, out_ref, acc_ref):
        c = pl.program_id(0)
        i = pl.program_id(1)

        @pl.when(i == 0)
        def _():
            acc_ref[...] = jnp.zeros_like(acc_ref)

        x = logits_ref[...].astype(jnp.float32)                  # (TR, L)
        y = target_ref[...].astype(jnp.float32)                  # (TR, L)

        p = jax.nn.sigmoid(x)
        loss = (-alpha) * y * pow_fn(1.0 - p) * jnp.log(p + epsilon)
        loss = loss + (-(1.0 - alpha)) * (1.0 - y) * pow_fn(p) * jnp.log(
            1.0 - p + epsilon)

        # Mask rows beyond the true row count (remainder / phantom tiles).
        v = c * tiles_per_core + i
        row = v * tr + jax.lax.broadcasted_iota(jnp.int32, loss.shape, 0)
        loss = jnp.where(row < total_rows, loss, 0.0)

        # Lane-dense accumulation: only a sublane reduce + VPU add per step.
        acc_ref[...] += jnp.sum(loss, axis=0, keepdims=True)     # (1, L)

        @pl.when(i == pl.num_programs(1) - 1)
        def _():
            out_ref[...] = jnp.sum(acc_ref[...]).reshape(1, 1, 1)

    return kernel


# ----------------------------------------------------------------------------
# module wrapper
# ----------------------------------------------------------------------------
class FocalLoss:
    """Pallas TPU implementation of the PyTorch FocalLoss module."""

    def __init__(self, num_labels, activation_type="softmax",
                 gamma=2.0, alpha=0.25, epsilon=1e-9):
        self.num_labels = num_labels
        self.activation_type = activation_type
        self.gamma = float(gamma)
        self.alpha = float(alpha)
        self.epsilon = float(epsilon)
        # Test-only hook: caps the row tile to exercise multi-tile / masked /
        # dual-chunk paths with small data.  None = "biggest tile that fits".
        self._tile_rows_cap = None

    def __call__(self, logits, target):
        B, C = logits.shape
        assert C == self.num_labels
        cap = _vmem_capacity_bytes()
        itemsize = jnp.dtype(logits.dtype).itemsize

        if self.activation_type == "softmax":
            tgt = target.reshape(B, 1).astype(jnp.int32)
            c_pad = _round_up(C, 128)
            # Lane-padded bytes per row: logits row + (TB,1) int32 target col.
            dbuf_row = c_pad * itemsize + 128 * 4
            temp_row = 4 * c_pad * 4          # f32 cast, e, iota, where-select
            TB = _pick_rows(B, dbuf_row, temp_row, cap, self._tile_rows_cap)
            nb = pl.cdiv(B, TB)               # real row-tile count
            rows, tile = B, TB
            kernel_factory = _softmax_focal_kernel
            in_block_shapes = [(TB, 1), (TB, C)]
            scratch = ()
            args = (tgt, logits)
            count = B
            usage = 2 * TB * dbuf_row + TB * temp_row

        elif self.activation_type == "sigmoid":
            # Purely elementwise + global mean: present a lane-dense slab when
            # the class axis is narrow and B*C folds cleanly into 128 lanes.
            if C % 128 == 0:
                R, L, x, y = B, C, logits, target
            elif (B * C) % 128 == 0:
                R, L = (B * C) // 128, 128
                x = logits.reshape(R, L)
                y = target.reshape(R, L)
            else:
                # TODO(synk): 1-D lane-dense (TR, 128) tiling with a tail mask.
                R, L, x, y = B, C, logits, target
            t_item = jnp.dtype(y.dtype).itemsize
            l_pad = _round_up(L, 128)
            dbuf_row = l_pad * (itemsize + t_item)
            temp_row = 4 * l_pad * 4
            TR = _pick_rows(R, dbuf_row, temp_row, cap, self._tile_rows_cap)
            nb = pl.cdiv(R, TR)
            rows, tile = R, TR
            kernel_factory = _sigmoid_focal_kernel
            in_block_shapes = [(TR, L), (TR, L)]
            scratch = (pltpu.VMEM((1, L), jnp.float32),)
            args = (y, x)
            count = B * C
            usage = 2 * TR * dbuf_row + TR * temp_row + l_pad * 4

        else:
            raise ValueError(f"unknown activation_type {self.activation_type}")

        # Leading "parallel" chunk axis: 2x on v7x (2 TCs), harmless (serial,
        # same math) on v5e/v6e.  Only used when there are enough tiles that a
        # possible phantom tail tile is a small fraction of the work.
        NC = 2 if nb >= 8 else 1
        T = pl.cdiv(nb, NC)

        kernel = kernel_factory(self.alpha, self.gamma, self.epsilon,
                                rows, tile, T)

        def blk(c, i, _T=T, _nb=nb):
            # Clamp phantom tail tiles onto the last real block; they are
            # fully masked in-kernel.
            return (jnp.minimum(c * _T + i, _nb - 1), 0)

        in_specs = [pl.BlockSpec(s, blk) for s in in_block_shapes]

        out = pl.pallas_call(
            kernel,
            out_shape=jax.ShapeDtypeStruct((NC, 1, 1), jnp.float32),
            grid=(NC, T),
            in_specs=in_specs,
            out_specs=pl.BlockSpec((1, 1, 1), lambda c, i: (c, 0, 0)),
            scratch_shapes=scratch,
            compiler_params=pltpu.CompilerParams(
                dimension_semantics=("parallel", "arbitrary"),
                vmem_limit_bytes=_vmem_limit_bytes(usage, cap)),
        )(*args)

        # Tiny cross-chunk add + mean divide in the wrapper.
        return jnp.sum(out) / float(count)


# ----------------------------------------------------------------------------
# references & self-test
# ----------------------------------------------------------------------------
def _reference_softmax_focal(logits, target, num_labels, alpha, gamma, eps):
    p = jax.nn.softmax(logits.astype(jnp.float32), axis=-1)
    one_hot = jax.nn.one_hot(target, num_labels, dtype=jnp.float32)
    loss = -alpha * one_hot * jnp.power(1.0 - p, gamma) * jnp.log(p + eps)
    return jnp.mean(jnp.sum(loss, axis=1))


def _reference_sigmoid_focal(logits, multi_hot, alpha, gamma, eps):
    p = jax.nn.sigmoid(logits.astype(jnp.float32))
    loss = (-alpha * multi_hot * jnp.power(1.0 - p, gamma) * jnp.log(p + eps)
            - (1.0 - alpha) * (1.0 - multi_hot) * jnp.power(p, gamma)
            * jnp.log(1.0 - p + eps))
    return jnp.mean(loss)


if __name__ == "__main__":
    key = jax.random.PRNGKey(0)
    ks = jax.random.split(key, 6)

    # ---- small shapes matching the module's forward ----
    B, num_labels = 8, 32
    logits = jax.random.normal(ks[0], (B, num_labels), dtype=jnp.float32)
    target = jax.random.randint(ks[1], (B,), 0, num_labels, dtype=jnp.int32)

    # softmax variant (module default)
    fl = FocalLoss(num_labels=num_labels, activation_type="softmax")
    loss = jax.block_until_ready(fl(logits, target))
    ref = _reference_softmax_focal(logits, target, num_labels,
                                   fl.alpha, fl.gamma, fl.epsilon)
    assert jnp.allclose(loss, ref, rtol=1e-4, atol=1e-6), (loss, ref)

    # sigmoid variant (multi-hot targets) — exercises the lane-dense reshape
    multi_hot = (jax.random.uniform(ks[2], (B, num_labels)) > 0.5).astype(
        jnp.float32)
    fl_sig = FocalLoss(num_labels=num_labels, activation_type="sigmoid")
    loss_sig = jax.block_until_ready(fl_sig(logits, multi_hot))
    ref_sig = _reference_sigmoid_focal(logits, multi_hot,
                                       fl_sig.alpha, fl_sig.gamma, fl_sig.epsilon)
    assert jnp.allclose(loss_sig, ref_sig, rtol=1e-4, atol=1e-6), (loss_sig, ref_sig)

    # ---- moderate shape; small tile cap forces the multi-tile, dual-chunk
    #      ("parallel" axis) and masked-remainder / phantom-tile paths ----
    B2 = 2000
    logits2 = jax.random.normal(ks[3], (B2, num_labels), dtype=jnp.float32)
    target2 = jax.random.randint(ks[4], (B2,), 0, num_labels, dtype=jnp.int32)
    fl_tiled = FocalLoss(num_labels=num_labels, activation_type="softmax")
    fl_tiled._tile_rows_cap = 128        # nb=16 -> NC=2, remainder masked
    loss2 = jax.block_until_ready(fl_tiled(logits2, target2))
    ref2 = _reference_softmax_focal(logits2, target2, num_labels,
                                    fl_tiled.alpha, fl_tiled.gamma,
                                    fl_tiled.epsilon)
    assert jnp.allclose(loss2, ref2, rtol=1e-4, atol=1e-6), (loss2, ref2)

    multi2 = (jax.random.uniform(ks[5], (B2, num_labels)) > 0.5).astype(
        jnp.float32)
    fl_sig2 = FocalLoss(num_labels=num_labels, activation_type="sigmoid")
    fl_sig2._tile_rows_cap = 64          # nb=8 -> NC=2, remainder masked
    loss_sig2 = jax.block_until_ready(fl_sig2(logits2, multi2))
    ref_sig2 = _reference_sigmoid_focal(logits2, multi2,
                                        fl_sig2.alpha, fl_sig2.gamma,
                                        fl_sig2.epsilon)
    assert jnp.allclose(loss_sig2, ref_sig2, rtol=1e-4, atol=1e-6), (
        loss_sig2, ref_sig2)

    print("KERNEL_OK")
</pallas_src>

<mosaic_0001>
module attributes {stable_mosaic.version = 11 : i64} {
  func.func @kernel(%arg0: i32, %arg1: i32, %arg2: memref<8x1xi32, #tpu.memory_space<vmem>>, %arg3: memref<8x32xf32, #tpu.memory_space<vmem>>, %arg4: memref<1x1x1xf32, #tpu.memory_space<vmem>>) attributes {dimension_semantics = [#tpu.dimension_semantics<parallel>, #tpu.dimension_semantics<arbitrary>], iteration_bounds = array<i64: 1, 1>, scalar_prefetch = 0 : i64, scratch_operands = 0 : i64, tpu.core_type = #tpu.core_type<tc>, window_params = [{transform_indices = @transform_0, window_bounds = array<i64: 8, 1>}, {transform_indices = @transform_1, window_bounds = array<i64: 8, 32>}, {transform_indices = @transform_2, window_bounds = array<i64: 1, 1, 1>}]} {
    %c0_i32 = arith.constant 0 : i32
    %0 = arith.cmpi eq, %arg1, %c0_i32 : i32
    %1 = arith.extui %0 : i1 to i32
    %c0_i32_0 = arith.constant 0 : i32
    %2 = arith.cmpi ne, %1, %c0_i32_0 : i32
    scf.if %2 {
      %cst_19 = arith.constant 0.000000e+00 : f32
      %47 = vector.broadcast %cst_19 : f32 to vector<1x1x1xf32>
      %c0_20 = arith.constant 0 : index
      %c0_21 = arith.constant 0 : index
      %c0_22 = arith.constant 0 : index
      %48 = vector.load %arg4[%c0_20, %c0_21, %c0_22] : memref<1x1x1xf32, #tpu.memory_space<vmem>>, vector<1x1x1xf32>
      tpu.vector_store %arg4[%c0_20, %c0_21, %c0_22], %47 {strides = array<i32>} : memref<1x1x1xf32, #tpu.memory_space<vmem>>, vector<1x1x1xf32>,
    } else {
    }
    %c0 = arith.constant 0 : index
    %c0_1 = arith.constant 0 : index
    %3 = vector.load %arg3[%c0, %c0_1] : memref<8x32xf32, #tpu.memory_space<vmem>>, vector<8x32xf32>
    %c0_2 = arith.constant 0 : index
    %c0_3 = arith.constant 0 : index
    %4 = vector.load %arg2[%c0_2, %c0_3] : memref<8x1xi32, #tpu.memory_space<vmem>>, vector<8x1xi32>
    %cst = arith.constant dense<0xFF800000> : vector<8xf32>
    %5 = vector.multi_reduction <maximumf>, %3, %cst [1] : vector<8x32xf32> to vector<8xf32>
    %6 = vector.shape_cast %5 : vector<8xf32> to vector<8x1xf32>
    %7 = vector.broadcast %6 : vector<8x1xf32> to vector<8x32xf32>
    %8 = arith.subf %3, %7 : vector<8x32xf32>
    %9 = math.exp %8 : vector<8x32xf32>
    %cst_4 = arith.constant dense<0.000000e+00> : vector<8xf32>
    %10 = vector.multi_reduction <add>, %9, %cst_4 [1] : vector<8x32xf32> to vector<8xf32>
    %11 = vector.shape_cast %10 : vector<8xf32> to vector<8x1xf32>
    %12 = tpu.iota {dimensions = array<i32: 1>} : vector<8x32xi32>
    %13 = vector.broadcast %4 : vector<8x1xi32> to vector<8x32xi32>
    %14 = arith.cmpi eq, %12, %13 : vector<8x32xi32>
    %cst_5 = arith.constant 0.000000e+00 : f32
    %15 = vector.broadcast %cst_5 : f32 to vector<8x32xf32>
    %16 = arith.select %14, %9, %15 : vector<8x32xi1>, vector<8x32xf32>
    %cst_6 = arith.constant dense<0.000000e+00> : vector<8xf32>
    %17 = vector.multi_reduction <add>, %16, %cst_6 [1] : vector<8x32xf32> to vector<8xf32>
    %18 = vector.shape_cast %17 : vector<8xf32> to vector<8x1xf32>
    %19 = arith.divf %18, %11 : vector<8x1xf32>
    %cst_7 = arith.constant 1.000000e+00 : f32
    %20 = vector.broadcast %cst_7 : f32 to vector<8x1xf32>
    %21 = arith.subf %20, %19 : vector<8x1xf32>
    %22 = arith.mulf %21, %21 : vector<8x1xf32>
    %cst_8 = arith.constant -2.500000e-01 : f32
    %23 = vector.broadcast %cst_8 : f32 to vector<8x1xf32>
    %24 = arith.mulf %23, %22 : vector<8x1xf32>
    %cst_9 = arith.constant 9.99999971E-10 : f32
    %25 = vector.broadcast %cst_9 : f32 to vector<8x1xf32>
    %26 = arith.addf %19, %25 : vector<8x1xf32>
    %27 = math.log %26 : vector<8x1xf32>
    %28 = arith.mulf %24, %27 : vector<8x1xf32>
    %c1_i32 = arith.constant 1 : i32
    %29 = arith.muli %arg0, %c1_i32 : i32
    %30 = arith.addi %29, %arg1 : i32
    %c8_i32 = arith.constant 8 : i32
    %31 = arith.muli %30, %c8_i32 : i32
    %32 = tpu.iota {dimensions = array<i32: 0>} : vector<8x1xi32>
    %33 = vector.broadcast %31 : i32 to vector<8x1xi32>
    %34 = arith.addi %33, %32 : vector<8x1xi32>
    %c8_i32_10 = arith.constant 8 : i32
    %35 = vector.broadcast %c8_i32_10 : i32 to vector<8x1xi32>
    %36 = arith.cmpi slt, %34, %35 : vector<8x1xi32>
    %cst_11 = arith.constant 0.000000e+00 : f32
    %37 = vector.broadcast %cst_11 : f32 to vector<8x1xf32>
    %38 = arith.select %36, %28, %37 : vector<8x1xi1>, vector<8x1xf32>
    %c0_12 = arith.constant 0 : index
    %c0_13 = arith.constant 0 : index
    %c0_14 = arith.constant 0 : index
    %39 = vector.load %arg4[%c0_12, %c0_13, %c0_14] : memref<1x1x1xf32, #tpu.memory_space<vmem>>, vector<1x1x1xf32>
    %40 = vector.shape_cast %38 : vector<8x1xf32> to vector<1x8x1xf32>
    %cst_15 = arith.constant dense<0.000000e+00> : vector<1xf32>
    %41 = vector.multi_reduction <add>, %40, %cst_15 [1, 2] : vector<1x8x1xf32> to vector<1xf32>
    %42 = vector.shape_cast %41 : vector<1xf32> to vector<1x1x1xf32>
    %43 = vector.extract %42[0, 0, 0] : f32 from vector<1x1x1xf32>
    %44 = vector.broadcast %43 : f32 to vector<1x1x1xf32>
    %45 = arith.addf %39, %44 : vector<1x1x1xf32>
    %c0_16 = arith.constant 0 : index
    %c0_17 = arith.constant 0 : index
    %c0_18 = arith.constant 0 : index
    %46 = vector.load %arg4[%c0_16, %c0_17, %c0_18] : memref<1x1x1xf32, #tpu.memory_space<vmem>>, vector<1x1x1xf32>
    tpu.vector_store %arg4[%c0_16, %c0_17, %c0_18], %45 {strides = array<i32>} : memref<1x1x1xf32, #tpu.memory_space<vmem>>, vector<1x1x1xf32>,
    return
  }
  func.func @transform_0(%arg0: i32, %arg1: i32) -> (i32, i32) {
    %c1_i32 = arith.constant 1 : i32
    %0 = arith.muli %arg0, %c1_i32 : i32
    %1 = arith.addi %0, %arg1 : i32
    %c0_i32 = arith.constant 0 : i32
    %2 = arith.minsi %1, %c0_i32 : i32
    %c0_i32_0 = arith.constant 0 : i32
    %c0_i32_1 = arith.constant 0 : i32
    return %2, %c0_i32_0 : i32, i32
  }
  func.func @transform_1(%arg0: i32, %arg1: i32) -> (i32, i32) {
    %c1_i32 = arith.constant 1 : i32
    %0 = arith.muli %arg0, %c1_i32 : i32
    %1 = arith.addi %0, %arg1 : i32
    %c0_i32 = arith.constant 0 : i32
    %2 = arith.minsi %1, %c0_i32 : i32
    %c0_i32_0 = arith.constant 0 : i32
    %c0_i32_1 = arith.constant 0 : i32
    return %2, %c0_i32_0 : i32, i32
  }
  func.func @transform_2(%arg0: i32, %arg1: i32) -> (i32, i32, i32) {
    %c0_i32 = arith.constant 0 : i32
    %c0_i32_0 = arith.constant 0 : i32
    %c0_i32_1 = arith.constant 0 : i32
    return %arg0, %c0_i32, %c0_i32_0 : i32, i32, i32
  }
}

</mosaic_0001>

<llo_original>
// kernel: tpu_custom_call.1
$region0: #{tpu_custom_call.1}
  #allocation0 [shape = 'u32[]', space=smem, size = 0x4, offset = 0x4, fixed_abs, tag = 'smem constant byte address 0x4 - core index']
  #allocation1 [shape = 'u32[144,128]{1,0:T(1,128)}', space=vmem, size = 0x12000, scoped, tag = 'internal scratch']
  %s0 = inlined_call_operand.vmem [shape: s32[8,1], index: 0, kind: input, shape index: {}]
  %s1 = inlined_call_operand.vmem [shape: f32[8,32], index: 1, kind: input, shape index: {}]
  %s2 = inlined_call_operand.hbm [shape: f32[1,1,1], index: 2, kind: output, shape index: {}]
  %s3 = sld [smem:[#allocation0]]
  $region22: #{tpu_custom_call.1} parent=0
    _
  %s5 = ssub.s32 1, %s3
  %s6 = scalar_select 0, %s5, %s3
  $region1: #{tpu_custom_call.1} parent=0
    #allocation2 [shape = 'u8[512]{0}', space=vmem, size = 0x400, scoped, tag = 'output window, operand 0, single buffered']
    #allocation3 [shape = 's32[1]{0}', space=sflag, size = 0x4, scoped, tag = 'scoped memory for tpu_custom_call.1']
    %7 = vsyncpa [#allocation3], 0
    // Predicated region
    $region2: #{tpu_custom_call.1} parent=1 // pred_check
      _
    $region3: #{tpu_custom_call.1} parent=1 // pred_check_branch
      %9 = sbr.rel (0) target = $region5
    $region4: #{tpu_custom_call.1} parent=1 // pred_region
      %s10 = sadd.s32 0, 0
      %p11 = scmp.lt.s32.totalorder %s10, 0
      %s12 = scalar_select %p11, %s10, 0
      %p13 = scmp.lt.s32.totalorder %s12, 0
      %s14 = scalar_select %p13, %s12, 0
      %s15 = smul.addr %s14, 8
      %s16 = scalar_lea.vmem %s0, %s15
      %s17 = sadd.s32 0, 0
      %p18 = scmp.lt.s32.totalorder %s17, 0
      %s19 = scalar_select %p18, %s17, 0
    $region5: #{tpu_custom_call.1} parent=1 // pred_fallthru
      _
    // Predicated region
    $region6: #{tpu_custom_call.1} parent=1 // pred_check
      _
    $region7: #{tpu_custom_call.1} parent=1 // pred_check_branch
      %21 = sbr.rel (0) target = $region9
    $region8: #{tpu_custom_call.1} parent=1 // pred_region
      %s22 = sadd.s32 0, 0
      %p23 = scmp.lt.s32.totalorder %s22, 0
      %s24 = scalar_select %p23, %s22, 0
      %p25 = scmp.lt.s32.totalorder %s24, 0
      %s26 = scalar_select %p25, %s24, 0
      %s27 = smul.addr %s26, 8
      %s28 = scalar_lea.vmem %s1, %s27
      %s29 = sadd.s32 0, 0
      %p30 = scmp.lt.s32.totalorder %s29, 0
      %s31 = scalar_select %p30, %s29, 0
    $region9: #{tpu_custom_call.1} parent=1 // pred_fallthru
      _
    %s32 = sadd.s32 0, 0
    %p33 = scmp.lt.s32.totalorder %s32, 0
    %s34 = scalar_select %p33, %s32, 0
    %p35 = scmp.lt.s32.totalorder %s34, 0
    %s36 = scalar_select %p35, %s34, 0
    %s37 = smul.addr %s36, 8
    %s38 = scalar_lea.vmem %s0, %s37
    %s39 = sadd.s32 0, 0
    %p40 = scmp.lt.s32.totalorder %s39, 0
    %s41 = scalar_select %p40, %s39, 0
    %p42 = scmp.lt.s32.totalorder %s41, 0
    %s43 = scalar_select %p42, %s41, 0
    %s44 = smul.addr %s43, 8
    %s45 = scalar_lea.vmem %s1, %s44
    %s46 = sadd.s32 0, 0
    %p47 = scmp.lt.s32.totalorder %s46, 0
    %s48 = scalar_select %p47, %s46, 0
    %p49 = scmp.lt.s32.totalorder %s48, 0
    %s50 = scalar_select %p49, %s48, 0
    %s51 = smul.addr %s50, 8
    %s52 = scalar_lea.vmem %s0, %s51
    %s53 = sadd.s32 0, 0
    %p54 = scmp.lt.s32.totalorder %s53, 0
    %s55 = scalar_select %p54, %s53, 0
    %s56 = sadd.s32 0, 0
    %p57 = scmp.lt.s32.totalorder %s56, 0
    %s58 = scalar_select %p57, %s56, 0
    %p59 = scmp.lt.s32.totalorder %s58, 0
    %s60 = scalar_select %p59, %s58, 0
    %s61 = smul.addr %s60, 8
    %s62 = scalar_lea.vmem %s1, %s61
    %s63 = sadd.s32 0, 0
    %p64 = scmp.lt.s32.totalorder %s63, 0
    %s65 = scalar_select %p64, %s63, 0
    %p66 = scmp.eq.s32.totalorder 0, 0
    // Predicated region
    $region10: #{tpu_custom_call.1} parent=1 // pred_check
      %p67 = pneg %p66
    $region11: #{tpu_custom_call.1} parent=1 // pred_check_branch
      %69 = sbr.rel (%p67) target = $region13
    $region12: #{tpu_custom_call.1} parent=1 // pred_region
      %vm70 = vcmask 0
      %71 = vst.msk [vmem:[#allocation2] sm:$0x1] %vm70, 0.0
    $region13: #{tpu_custom_call.1} parent=1 // pred_fallthru
      _
    %v72 = vld [vmem:[%s62] sm:$0xff]
    %v73 = vld [vmem:[%s52] sm:$0xff]
    %vm74 = vcmask 261120
    %v75 = vsel %vm74, %v72, -inf
    %76 = vmax.xlane.f32.xlu0 %v75
    %v77 = vpop.xlane.xlu0 %76
    %v78 = vsub.f32 %v72, %v77
    %v79 = vmul.f32 %v78, 1.442695
    %v80 = vpow.pop %v79
    %v81 = vsel %vm74, %v80, 0.0
    %82 = vadd.xlane.f32.xlu0 %v81
    %v83 = vpop.xlane.xlu0 %82
    %v84 = vlaneseq
    %v85 = vand.u32 %v84, 127
    %86 = vset.pattern.permute.xlu0 0
    %87 = vperm.xlu0 %86, %v73
    %v88 = vpop.permute.xlu0 %87
    %vm89 = vcmp.eq.s32.totalorder %v85, %v88
    %v90 = vsel %vm89, %v80, 0.0
    %v91 = vsel %vm74, %v90, 0.0
    %92 = vadd.xlane.f32.xlu0 %v91
    %v93 = vpop.xlane.xlu0 %92
    %v94 = vrcp.pop %v83
    %v95 = vmul.f32 %v93, %v94
    %v96 = vsub.f32 1.0, %v95
    %v97 = vmul.f32 %v96, %v96
    %v98 = vmul.f32 %v97, -0.25
    %v99 = vadd.f32 %v95, 1e-09
    %v100 = vlog2.pop %v99
    %v101 = vmul.f32 %v100, 0.6931472
    %v102 = vmul.f32 %v98, %v101
    %s103 = sadd.s32 0, 0
    %s104 = smul.u32 %s103, 8
    %v105 = vlaneseq
    %v106 = vshrl.u32 %v105, 7
    %v107 = vstv %s104
    %v108 = vadd.s32 %v107, %v106
    %vm109 = vcmp.lt.s32.totalorder %v108, 8
    %v110 = vsel %vm109, %v102, 0.0
    %v111 = vld [vmem:[#allocation2] sm:$0x1]
    %vm112 = vcmask 7168
    %v113 = vsel %vm112, %v110, 0.0
    %114 = vadd.xlane.f32.xlu0 %v113
    %v115 = vpop.xlane.xlu0 %114
    %v116 = vrot.slane %v115, 4
    %v117 = vadd.f32 %v115, %v116
    %v118 = vrot.slane %v117, 2
    %v119 = vadd.f32 %v117, %v118
    %v120 = vrot.slane %v119, 1
    %v121 = vadd.f32 %v119, %v120
    %s122 = vtos %v121
    %v123 = vstv %s122
    %v124 = vadd.f32 %v111, %v123
    %vm125 = vcmask 0
    %126 = vst.msk [vmem:[#allocation2] sm:$0x1] %vm125, %v124
    // Predicated region
    $region14: #{tpu_custom_call.1} parent=1 // pred_check
      _
    $region15: #{tpu_custom_call.1} parent=1 // pred_check_branch
      %128 = sbr.rel (0) target = $region17
    $region16: #{tpu_custom_call.1} parent=1 // pred_region
      %s130 = ssub.s32 16, 16
      %131 = vsyncadd [#allocation3], %s130
      %s133 = sshll.u32 [#allocation2], 4
      %s134 = int_to_ptr.vmem [resolvable:$true] %s133
      %136 = dma.vmem_to_hbm [thread:$0]  %s134, 16, %s2, [#allocation3]
    $region17: #{tpu_custom_call.1} parent=1 // pred_fallthru
      _
    // Predicated region
    $region18: #{tpu_custom_call.1} parent=1 // pred_check
      _
    $region19: #{tpu_custom_call.1} parent=1 // pred_check_branch
      %138 = sbr.rel (0) target = $region21
    $region20: #{tpu_custom_call.1} parent=1 // pred_region
      %139 = dma.done [#allocation3], 16
    $region21: #{tpu_custom_call.1} parent=1 // pred_fallthru
      _
    %140 = vsyncpa [#allocation3], 1

</llo_original>
